<compile_context>
chip_gen: v5e
topology: v5e:2x2
jax: 0.10.0
libtpu: 0.0.40
codegen_flags: <defaults>
</compile_context>

<pallas_src>
import jax
import jax.numpy as jnp
import numpy as np
from jax.experimental import pallas as pl
from jax.experimental.pallas import tpu as pltpu


def _round_up(x, m):
    return ((x + m - 1) // m) * m


def _round_down(x, m):
    return (x // m) * m


def iweights_kernel(w_ref, coeff_ref, o_ref):
    # out = w * coeff   (coeff already includes train_volume; broadcast over lanes).
    # coeff_ref holds the whole (row-padded) coefficient column resident in VMEM;
    # slice this block's rows instead of double-buffering a (tm, 1) stream.
    tm = o_ref.shape[0]
    start = pl.multiple_of(pl.program_id(0) * tm, tm)
    c = coeff_ref[pl.ds(start, tm), :]
    o_ref[...] = (w_ref[...] * c).astype(o_ref.dtype)


def iweights_forward(w2d, coeff, train_volume, *,
                     min_pallas_bytes=1 << 20,
                     tile_budget_bytes=(5 << 20) // 2,
                     donate_weight=False):
    """IWeights forward on a flattened conv weight.

    w2d:          [C_out, C_in*kH*kW]  (integration dim = 0, mapped to sublanes)
    coeff:        [C_out] trapezoidal quadrature coefficients
    train_volume: python float, 0.5 * prod(n_d - 1)
    """
    c_out, inner = w2d.shape
    itemsize = jnp.dtype(w2d.dtype).itemsize

    # Fold the scalar train_volume into the tiny O(C_out) coeff vector (wrapper-side;
    # never pre-scale the big weight tensor).  Kept in f32 for the multiply.
    coeff_col = (coeff.astype(jnp.float32) * jnp.float32(train_volume)).reshape(c_out, 1)

    # Small weights: pallas launch + per-grid-step overhead dominate a pure
    # HBM-bandwidth-bound multiply with zero arithmetic intensity -> let XLA fuse it.
    if c_out * inner * itemsize < min_pallas_bytes:
        return (w2d * coeff_col).astype(w2d.dtype)

    # Lane-dense layout: pad the inner (lane) dim to a multiple of 128 so every store
    # is an unmasked full-lane vst; the padded zero columns are sliced off afterwards.
    inner_p = _round_up(inner, 128)
    w_in = w2d if inner_p == inner else jnp.pad(w2d, ((0, 0), (0, inner_p - inner)))

    # Dtype-dependent sublane alignment: 8 rows/vreg for 4-byte, 16 for 2-byte,
    # 32 for 1-byte packed dtypes.
    sub_align = 8 * (4 // itemsize)

    # Tile selection: prefer full rows (tn = inner_p) and as many rows as fit the
    # per-tile budget; fall back to tiling N only for extremely wide inner dims.
    if sub_align * inner_p * itemsize <= tile_budget_bytes:
        tn = inner_p
        rows = _round_down(tile_budget_bytes // (inner_p * itemsize), sub_align)
        tm = min(c_out, max(sub_align, rows))
    else:
        tm = sub_align
        tn = min(inner_p,
                 max(128, _round_down(tile_budget_bytes // (sub_align * itemsize), 128)))

    # Guarantee >= 2 row blocks so the "parallel" axis can be split across the two
    # TensorCores on v7x (one extra ~0.35 us step; harmless on single-TC v5e/v6e).
    if tm >= c_out and c_out >= 2 * sub_align:
        tm = _round_up(-(-c_out // 2), sub_align)

    grid_m = pl.cdiv(c_out, tm)
    grid_n = pl.cdiv(inner_p, tn)

    # Pad the tiny coeff column so the in-kernel pl.ds row slice stays in bounds for
    # the masked partial tail block (garbage rows never reach the output).
    coeff_rows = max(c_out, grid_m * tm)
    if coeff_rows > c_out:
        coeff_col = jnp.pad(coeff_col, ((0, coeff_rows - c_out), (0, 0)))

    out = pl.pallas_call(
        iweights_kernel,
        out_shape=jax.ShapeDtypeStruct((c_out, inner_p), w2d.dtype),
        grid_spec=pltpu.PrefetchScalarGridSpec(
            num_scalar_prefetch=0,
            grid=(grid_m, grid_n),
            in_specs=[
                # Big weight stream: auto double-buffered, DMA overlapped with the
                # trivial VPU multiply.
                pl.BlockSpec((tm, tn), lambda i, j: (i, j)),
                # Tiny coeff column: constant block index -> fetched once, resident.
                pl.BlockSpec((coeff_rows, 1), lambda i, j: (0, 0)),
            ],
            out_specs=pl.BlockSpec((tm, tn), lambda i, j: (i, j)),
        ),
        compiler_params=pltpu.CompilerParams(
            dimension_semantics=("parallel", "parallel"),
        ),
        input_output_aliases={0: 0} if donate_weight else {},
    )(w_in, coeff_col)

    return out if inner_p == inner else out[:, :inner]


def trapezoidal_coeffs(x):
    """TrapezoidalQuadrature coefficients on grid x (guards the n == 1 case)."""
    n = x.shape[0]
    if n == 1:
        return jnp.ones((1,), dtype=jnp.float32)
    return jnp.concatenate([
        (x[1:2] - x[0:1]) * 0.5,
        (x[2:] - x[:-2]) * 0.5,
        (x[-1:] - x[-2:-1]) * 0.5,
    ]).astype(jnp.float32)


def _ref(w2d, coeff, vol):
    scale = (coeff.astype(jnp.float32) * jnp.float32(vol)).reshape(-1, 1)
    return (w2d.astype(jnp.float32) * scale).astype(w2d.dtype)


if __name__ == "__main__":
    key = jax.random.PRNGKey(0)
    k1, k2, k3 = jax.random.split(key, 3)

    # --- Test 1: small conv-like weight (OIHW, 16x16x3x3) -> below the size cutoff,
    #             takes the fused-XLA path.
    C_out, C_in, kH, kW = 16, 16, 3, 3
    w4 = jax.random.normal(k1, (C_out, C_in, kH, kW), dtype=jnp.float32)
    w2d = w4.reshape(C_out, C_in * kH * kW)
    coeff1 = trapezoidal_coeffs(jnp.linspace(-1.0, 1.0, C_out))
    vol1 = 0.5 * (C_out - 1)
    out1 = jax.block_until_ready(iweights_forward(w2d, coeff1, vol1))
    np.testing.assert_allclose(np.asarray(out1), np.asarray(_ref(w2d, coeff1, vol1)),
                               rtol=1e-6, atol=1e-6)

    # --- Test 2: force the Pallas path on a small, awkward shape: lane padding
    #             (300 -> 384), 2 row blocks with a masked partial tail, padded coeff.
    M2, N2 = 20, 300
    w_b = jax.random.normal(k2, (M2, N2), dtype=jnp.float32)
    coeff2 = trapezoidal_coeffs(jnp.linspace(-1.0, 1.0, M2))
    vol2 = 0.5 * (M2 - 1)
    out2 = jax.block_until_ready(iweights_forward(w_b, coeff2, vol2, min_pallas_bytes=0))
    np.testing.assert_allclose(np.asarray(out2), np.asarray(_ref(w_b, coeff2, vol2)),
                               rtol=1e-6, atol=1e-6)

    # --- Test 3: bf16 weight big enough to take the Pallas path naturally;
    #             inner = 256*3*3 = 2304 is a multiple of 128 -> lane-dense stores,
    #             tm rounded to the bf16 sublane alignment (16).
    C3, Ci3 = 256, 256
    w3 = jax.random.normal(k3, (C3, Ci3 * 3 * 3), dtype=jnp.float32).astype(jnp.bfloat16)
    coeff3 = trapezoidal_coeffs(jnp.linspace(-1.0, 1.0, C3))
    vol3 = 0.5 * (C3 - 1)
    out3 = jax.block_until_ready(iweights_forward(w3, coeff3, vol3))
    np.testing.assert_allclose(np.asarray(out3, dtype=np.float32),
                               np.asarray(_ref(w3, coeff3, vol3), dtype=np.float32),
                               rtol=2e-2, atol=2e-2)

    print("KERNEL_OK")
</pallas_src>

<mosaic_0001>
module attributes {stable_mosaic.version = 11 : i64} {
  func.func @iweights_kernel(%arg0: i32, %arg1: i32, %arg2: memref<16x384xf32, #tpu.memory_space<vmem>>, %arg3: memref<32x1xf32, #tpu.memory_space<vmem>>, %arg4: memref<16x384xf32, #tpu.memory_space<vmem>>) attributes {dimension_semantics = [#tpu.dimension_semantics<parallel>, #tpu.dimension_semantics<parallel>], iteration_bounds = array<i64: 2, 1>, scalar_prefetch = 0 : i64, scratch_operands = 0 : i64, tpu.core_type = #tpu.core_type<tc>, window_params = [{transform_indices = @transform_0, window_bounds = array<i64: 16, 384>}, {pipeline_mode = #tpu.pipeline_mode<synchronous>, transform_indices = @transform_1, window_bounds = array<i64: 32, 1>}, {transform_indices = @transform_2, window_bounds = array<i64: 16, 384>}]} {
    %c16_i32 = arith.constant 16 : i32
    %0 = arith.muli %arg0, %c16_i32 : i32
    %1 = tpu.assume_multiple %0, 16 : i32
    %2 = arith.index_cast %1 : i32 to index
    %c0 = arith.constant 0 : index
    %3 = vector.load %arg3[%2, %c0] : memref<32x1xf32, #tpu.memory_space<vmem>>, vector<16x1xf32>
    %c0_0 = arith.constant 0 : index
    %c0_1 = arith.constant 0 : index
    %4 = vector.load %arg2[%c0_0, %c0_1] : memref<16x384xf32, #tpu.memory_space<vmem>>, vector<16x384xf32>
    %5 = vector.broadcast %3 : vector<16x1xf32> to vector<16x384xf32>
    %6 = arith.mulf %4, %5 : vector<16x384xf32>
    %c0_2 = arith.constant 0 : index
    %c0_3 = arith.constant 0 : index
    %7 = vector.load %arg4[%c0_2, %c0_3] : memref<16x384xf32, #tpu.memory_space<vmem>>, vector<16x384xf32>
    tpu.vector_store %arg4[%c0_2, %c0_3], %6 {strides = array<i32>} : memref<16x384xf32, #tpu.memory_space<vmem>>, vector<16x384xf32>,
    return
  }
  func.func @transform_0(%arg0: i32, %arg1: i32) -> (i32, i32) {
    %c0_i32 = arith.constant 0 : i32
    return %arg0, %arg1 : i32, i32
  }
  func.func @transform_1(%arg0: i32, %arg1: i32) -> (i32, i32) {
    %c0_i32 = arith.constant 0 : i32
    %c0_i32_0 = arith.constant 0 : i32
    %c0_i32_1 = arith.constant 0 : i32
    return %c0_i32, %c0_i32_0 : i32, i32
  }
  func.func @transform_2(%arg0: i32, %arg1: i32) -> (i32, i32) {
    %c0_i32 = arith.constant 0 : i32
    return %arg0, %arg1 : i32, i32
  }
}

</mosaic_0001>

<llo_original>
// kernel: tpu_custom_call.1
$region0: #{tpu_custom_call.1}
  #allocation0 [shape = 'u32[]', space=smem, size = 0x4, offset = 0x4, fixed_abs, tag = 'smem constant byte address 0x4 - core index']
  #allocation1 [shape = 'u32[72,128]{1,0:T(1,128)}', space=vmem, size = 0x9000, scoped, tag = 'internal scratch']
  %s0 = inlined_call_operand.hbm [shape: f32[20,384], index: 0, kind: input, shape index: {}]
  %s1 = inlined_call_operand.vmem [shape: f32[32,1], index: 1, kind: input, shape index: {}]
  %s2 = inlined_call_operand.hbm [shape: f32[20,384], index: 2, kind: output, shape index: {}]
  %s3 = sld [smem:[#allocation0]]
  $region45: #{tpu_custom_call.1} parent=0
    _
  %s5 = ssub.s32 1, %s3
  %s6 = scalar_select 0, %s5, %s3
  $region1: #{tpu_custom_call.1} parent=0
    #allocation2 [shape = 'u8[49152]{0}', space=vmem, size = 0xc000, scoped, tag = 'input window, operand 0']
    #allocation3 [shape = 's32[2]{0}', space=sflag, size = 0x8, scoped, tag = 'scoped memory for tpu_custom_call.1']
    #allocation4 [shape = 's32[2]{0}', space=sflag, size = 0x8, scoped, tag = 'scoped memory for tpu_custom_call.1']
    #allocation5 [shape = 'u8[49152]{0}', space=vmem, size = 0xc000, scoped, tag = 'output window, operand 0']
    %7 = vsyncpa [#allocation3], 0
    %s8 = scalar_lea.sflag [#allocation3], 1
    %9 = vsyncpa %s8, 0
    %10 = vsyncpa [#allocation4], 0
    %s11 = scalar_lea.sflag [#allocation4], 1
    %12 = vsyncpa %s11, 0
    loop: start=0, step=1, limit=4
    $region2: #{tpu_custom_call.1} parent=1 // loop_pre_header
      _
    $region3: #{tpu_custom_call.1} parent=1 // loop_header
      %s14 = sphi 0, %s18
      %p15 = scmp.ge.s32.totalorder %s14, 4
      %s21 = sphi 0, %s33
      %s22 = sphi 0, %s29
      %s23 = sphi 0, %s21
      %s24 = sphi 0, %s22
      %s25 = sphi 0, %s23
      %s26 = sphi 0, %s24
      %s38 = sphi 0, %s40
      %s41 = sphi 0, %s38
      %s42 = sphi 0, %s41
      %s58 = sphi 0, %s42
      %s62 = sphi 0, %s62
      %s64 = sphi 0, %s62
      %s65 = sphi 0, %s64
      %s79 = sphi 0, %s65
      %s87 = sphi 0, %s89
      %s90 = sphi 0, %s87
      %s91 = sphi 0, %s90
      %s107 = sphi 0, %s91
    $region4: #{tpu_custom_call.1} parent=1 // loop_header_branch
      %17 = sbr.rel (%p15) target = $region8
    $region5: #{tpu_custom_call.1} parent=1 // loop_body
      %s19 = ssub.s32 %s14, 1
      %s20 = ssub.s32 %s14, 2
      %s27 = sadd.s32 1, %s22
      %p28 = scmp.ge.s32.totalorder %s27, 1
      %s29 = scalar_select %p28, 0, %s27
      %s30 = sadd.s32 1, %s21
      %s31 = scalar_select %p28, %s30, %s21
      %p32 = scmp.ge.s32.totalorder %s31, 2
      %s33 = scalar_select %p32, 0, %s31
      %s34 = ssub.s32 %s21, %s33
      %s35 = ssub.s32 %s22, %s29
      %s36 = sor.u32 %s34, %s35
      %p37 = scmp.eq.s32.totalorder %s36, 0
      %s39 = sadd.s32 %s38, 1
      %s40 = scalar_select %p37, %s38, %s39
      %p43 = pneg %p37
      %p44 = scmp.eq.s32.totalorder %s14, 1
      %p45 = por %p43, %p44
      %p46 = scmp.ne.s32.totalorder %s38, %s41
      %p47 = scmp.eq.s32.totalorder %s14, 0
      %p48 = por %p46, %p47
      %p49 = scmp.ne.s32.totalorder %s38, %s41
      %p50 = scmp.eq.s32.totalorder %s19, 1
      %p51 = por %p49, %p50
      %p52 = scmp.ne.s32.totalorder %s41, %s42
      %p53 = scmp.eq.s32.totalorder %s19, 0
      %p54 = por %p52, %p53
      %p55 = scmp.ne.s32.totalorder %s41, %s42
      %p56 = scmp.eq.s32.totalorder %s20, 1
      %p57 = por %p55, %p56
      %p59 = scmp.ne.s32.totalorder %s42, %s58
      %p60 = scmp.eq.s32.totalorder %s20, 0
      %p61 = por %p59, %p60
      %s63 = sadd.s32 %s62, 1
      %p66 = scmp.eq.s32.totalorder %s14, 1
      %p67 = scmp.ne.s32.totalorder %s62, %s64
      %p68 = scmp.eq.s32.totalorder %s14, 0
      %p69 = por %p67, %p68
      %p70 = scmp.ne.s32.totalorder %s62, %s64
      %p71 = scmp.eq.s32.totalorder %s19, 1
      %p72 = por %p70, %p71
      %p73 = scmp.ne.s32.totalorder %s64, %s65
      %p74 = scmp.eq.s32.totalorder %s19, 0
      %p75 = por %p73, %p74
      %p76 = scmp.ne.s32.totalorder %s64, %s65
      %p77 = scmp.eq.s32.totalorder %s20, 1
      %p78 = por %p76, %p77
      %p80 = scmp.ne.s32.totalorder %s65, %s79
      %p81 = scmp.eq.s32.totalorder %s20, 0
      %p82 = por %p80, %p81
      %s83 = ssub.s32 %s21, %s33
      %s84 = ssub.s32 %s22, %s29
      %s85 = sor.u32 %s83, %s84
      %p86 = scmp.eq.s32.totalorder %s85, 0
      %s88 = sadd.s32 %s87, 1
      %s89 = scalar_select %p86, %s87, %s88
      %p92 = pneg %p86
      %p93 = scmp.eq.s32.totalorder %s14, 1
      %p94 = por %p92, %p93
      %p95 = scmp.ne.s32.totalorder %s87, %s90
      %p96 = scmp.eq.s32.totalorder %s14, 0
      %p97 = por %p95, %p96
      %p98 = scmp.ne.s32.totalorder %s87, %s90
      %p99 = scmp.eq.s32.totalorder %s19, 1
      %p100 = por %p98, %p99
      %p101 = scmp.ne.s32.totalorder %s90, %s91
      %p102 = scmp.eq.s32.totalorder %s19, 0
      %p103 = por %p101, %p102
      %p104 = scmp.ne.s32.totalorder %s90, %s91
      %p105 = scmp.eq.s32.totalorder %s20, 1
      %p106 = por %p104, %p105
      %p108 = scmp.ne.s32.totalorder %s91, %s107
      %p109 = scmp.eq.s32.totalorder %s20, 0
      %p110 = por %p108, %p109
      %p111 = scmp.le.s32.totalorder 1, %s14
      %p112 = scmp.lt.s32.totalorder %s14, 3
      %p113 = pnand %p111, %p112
      %p114 = pneg %p113
      // Predicated region
      $region9: #{tpu_custom_call.1} parent=5 // pred_check
        _
      $region10: #{tpu_custom_call.1} parent=5 // pred_check_branch
        %116 = sbr.rel (%p113) target = $region12
      $region11: #{tpu_custom_call.1} parent=5 // pred_region
        %s117 = ssub.s32 %s14, 1
        // Predicated region
        $region13: #{tpu_custom_call.1} parent=11 // pred_check
          %p118 = pneg %p75
        $region14: #{tpu_custom_call.1} parent=11 // pred_check_branch
          %120 = sbr.rel (%p118) target = $region16
        $region15: #{tpu_custom_call.1} parent=11 // pred_region
          _
        $region16: #{tpu_custom_call.1} parent=11 // pred_fallthru
          _
      $region12: #{tpu_custom_call.1} parent=5 // pred_fallthru
        _
      %p121 = scmp.lt.s32.totalorder %s14, 2
      // Predicated region
      $region17: #{tpu_custom_call.1} parent=5 // pred_check
        %p122 = pneg %p121
      $region18: #{tpu_custom_call.1} parent=5 // pred_check_branch
        %124 = sbr.rel (%p122) target = $region20
      $region19: #{tpu_custom_call.1} parent=5 // pred_region
        // Predicated region
        $region21: #{tpu_custom_call.1} parent=19 // pred_check
          %p125 = pneg %p48
        $region22: #{tpu_custom_call.1} parent=19 // pred_check_branch
          %127 = sbr.rel (%p125) target = $region24
        $region23: #{tpu_custom_call.1} parent=19 // pred_region
          %s128 = sand.u32 %s38, 1
          %s129 = scalar_lea.sflag [#allocation3], %s128
          %s130 = sand.u32 %s38, 1
          %s131 = smul.addr %s130, 48
          %s132 = scalar_lea.vmem [#allocation2], %s131
          %s133 = smul.u32 2, %s21
          %s134 = smul.u32 3, %s22
          %s135 = ssub.s32 3, %s133
          %p136 = scmp.lt.s32.totalorder %s135, 2
          %s137 = scalar_select %p136, %s135, 2
          %s138 = smul.u32 8, %s137
          %s139 = smul.u32 %s138, 3
          %s140 = ssub.s32 48, %s139
          %s141 = sshll.u32 %s140, 4
          %142 = vsyncadd %s129, %s141
          %p143 = scmp.ne.s32.totalorder 0, %s139
          %s144 = smul.addr %s133, 3
          %s145 = sadd.s32 %s134, %s144
          %s146 = smul.addr %s145, 8
          %s147 = scalar_lea.hbm %s0, %s146
          %s148 = smul.u32 24, %s137
          %s149 = sshll.u32 %s147, 4
          %s150 = int_to_ptr.hbm [resolvable:$true] %s149
          %s151 = sshll.u32 %s132, 4
          %s152 = int_to_ptr.vmem [resolvable:$true] %s151
          %s153 = sshll.u32 %s148, 4
          %157 = dma.hbm_to_vmem [thread:$0]  (%p143), %s150, %s153, %s152, %s129, 384, 384, 24
        $region24: #{tpu_custom_call.1} parent=19 // pred_fallthru
          _
      $region20: #{tpu_custom_call.1} parent=5 // pred_fallthru
        _
      %p158 = scmp.le.s32.totalorder 1, %s14
      %p159 = scmp.lt.s32.totalorder %s14, 3
      %p160 = pnand %p158, %p159
      %p161 = pneg %p160
      // Predicated region
      $region25: #{tpu_custom_call.1} parent=5 // pred_check
        _
      $region26: #{tpu_custom_call.1} parent=5 // pred_check_branch
        %163 = sbr.rel (%p160) target = $region28
      $region27: #{tpu_custom_call.1} parent=5 // pred_region
        %s164 = ssub.s32 %s14, 1
        %s165 = sand.u32 %s41, 1
        %s166 = scalar_lea.sflag [#allocation3], %s165
        %s167 = sand.u32 %s41, 1
        %s168 = smul.addr %s167, 48
        %s169 = scalar_lea.vmem [#allocation2], %s168
        // Predicated region
        $region29: #{tpu_custom_call.1} parent=27 // pred_check
          %p170 = pneg %p54
        $region30: #{tpu_custom_call.1} parent=27 // pred_check_branch
          %172 = sbr.rel (%p170) target = $region32
        $region31: #{tpu_custom_call.1} parent=27 // pred_region
          %174 = dma.done %s166, 768
        $region32: #{tpu_custom_call.1} parent=27 // pred_fallthru
          _
        %s175 = sand.u32 %s41, 1
        %s176 = scalar_lea.sflag [#allocation3], %s175
        %s177 = sand.u32 %s41, 1
        %s178 = smul.addr %s177, 48
        %s179 = scalar_lea.vmem [#allocation2], %s178
        %p180 = pneg %p54
        %p181 = pneg %p51
        %p182 = pneg %p75
        %p183 = pneg %p72
        %p184 = pneg %p103
        %p185 = pneg %p100
        %s186 = sand.u32 %s90, 1
        %s187 = scalar_lea.sflag [#allocation4], %s186
        %s188 = sand.u32 %s90, 1
        %s189 = smul.addr %s188, 48
        %s190 = scalar_lea.vmem [#allocation5], %s189
        %s191 = smul.u32 2, %s23
        %s192 = smul.u32 3, %s24
        %s193 = ssub.s32 3, %s191
        %p194 = scmp.lt.s32.totalorder %s193, 2
        %s195 = scalar_select %p194, %s193, 2
        %s196 = smul.u32 8, %s195
        %s197 = smul.u32 %s196, 3
        %s198 = smul.u32 2, %s23
        %s199 = smul.u32 3, %s24
        %s200 = ssub.s32 3, %s198
        %p201 = scmp.lt.s32.totalorder %s200, 2
        %s202 = scalar_select %p201, %s200, 2
        %s203 = smul.u32 8, %s202
        %s204 = smul.u32 %s203, 3
        %s205 = smul.u32 %s23, 16
        %s206 = scalar_lea.vmem %s1, %s205
        %v207 = vld [vmem:[%s206] sm:$0xff]
        %v208 = vld [vmem:[%s206 + $0x8] sm:$0xff]
        %v209 = vld [vmem:[%s169] sm:$0xff]
        %v210 = vld [vmem:[%s169 + $0x8] sm:$0xff]
        %v211 = vld [vmem:[%s169 + $0x10] sm:$0xff]
        %v212 = vld [vmem:[%s169 + $0x18] sm:$0xff]
        %v213 = vld [vmem:[%s169 + $0x20] sm:$0xff]
        %v214 = vld [vmem:[%s169 + $0x28] sm:$0xff]
        %216 = vset.pattern.permute.xlu0 0
        %217 = vperm.xlu0 %216, %v207
        %v218 = vpop.permute.xlu0 %217
        %221 = vset.pattern.permute.xlu0 0
        %222 = vperm.xlu0 %221, %v208
        %v223 = vpop.permute.xlu0 %222
        %v225 = vmul.f32 %v209, %v218
        %v226 = vmul.f32 %v210, %v218
        %v227 = vmul.f32 %v211, %v218
        %v228 = vmul.f32 %v212, %v223
        %v229 = vmul.f32 %v213, %v223
        %v230 = vmul.f32 %v214, %v223
        %231 = vst [vmem:[%s190] sm:$0xff] %v225
        %232 = vst [vmem:[%s190 + $0x8] sm:$0xff] %v226
        %233 = vst [vmem:[%s190 + $0x10] sm:$0xff] %v227
        %234 = vst [vmem:[%s190 + $0x18] sm:$0xff] %v228
        %235 = vst [vmem:[%s190 + $0x20] sm:$0xff] %v229
        %236 = vst [vmem:[%s190 + $0x28] sm:$0xff] %v230
        %s237 = sand.u32 %s90, 1
        %s238 = scalar_lea.sflag [#allocation4], %s237
        %s239 = sand.u32 %s90, 1
        %s240 = smul.addr %s239, 48
        %s241 = scalar_lea.vmem [#allocation5], %s240
        // Predicated region
        $region33: #{tpu_custom_call.1} parent=27 // pred_check
          %p242 = pneg %p100
        $region34: #{tpu_custom_call.1} parent=27 // pred_check_branch
          %244 = sbr.rel (%p242) target = $region36
        $region35: #{tpu_custom_call.1} parent=27 // pred_region
          %s245 = smul.u32 2, %s23
          %s246 = smul.u32 3, %s24
          %s247 = ssub.s32 3, %s245
          %p248 = scmp.lt.s32.totalorder %s247, 2
          %s249 = scalar_select %p248, %s247, 2
          %s250 = smul.u32 8, %s249
          %s251 = smul.u32 %s250, 3
          %s252 = ssub.s32 48, %s251
          %s253 = sshll.u32 %s252, 4
          %254 = vsyncadd %s238, %s253
          %p255 = scmp.ne.s32.totalorder 0, %s251
          %s256 = smul.addr %s245, 3
          %s257 = sadd.s32 %s246, %s256
          %s258 = smul.addr %s257, 8
          %s259 = scalar_lea.hbm %s2, %s258
          %s260 = smul.u32 24, %s249
          %s261 = sshll.u32 %s241, 4
          %s262 = int_to_ptr.vmem [resolvable:$true] %s261
          %s263 = sshll.u32 %s259, 4
          %s264 = int_to_ptr.hbm [resolvable:$true] %s263
          %s265 = sshll.u32 %s260, 4
          %269 = dma.vmem_to_hbm [thread:$0]  (%p255), %s262, %s265, %s264, %s238, 384, 384, 24
        $region36: #{tpu_custom_call.1} parent=27 // pred_fallthru
          _
      $region28: #{tpu_custom_call.1} parent=5 // pred_fallthru
        _
      %p270 = scmp.le.s32.totalorder 2, %s14
      // Predicated region
      $region37: #{tpu_custom_call.1} parent=5 // pred_check
        %p271 = pneg %p270
      $region38: #{tpu_custom_call.1} parent=5 // pred_check_branch
        %273 = sbr.rel (%p271) target = $region40
      $region39: #{tpu_custom_call.1} parent=5 // pred_region
        %s274 = ssub.s32 %s14, 2
        // Predicated region
        $region41: #{tpu_custom_call.1} parent=39 // pred_check
          %p275 = pneg %p106
        $region42: #{tpu_custom_call.1} parent=39 // pred_check_branch
          %277 = sbr.rel (%p275) target = $region44
        $region43: #{tpu_custom_call.1} parent=39 // pred_region
          %s278 = sand.u32 %s91, 1
          %s279 = scalar_lea.sflag [#allocation4], %s278
          %s280 = sand.u32 %s91, 1
          %s281 = smul.addr %s280, 48
          %s282 = scalar_lea.vmem [#allocation5], %s281
          %284 = dma.done %s279, 768
        $region44: #{tpu_custom_call.1} parent=39 // pred_fallthru
          _
      $region40: #{tpu_custom_call.1} parent=5 // pred_fallthru
        _
    $region6: #{tpu_custom_call.1} parent=1 // loop_footer
      %s18 = sadd.s32 1, %s14
    $region7: #{tpu_custom_call.1} parent=1 // loop_footer_branch
      %13 = sbr.rel target = $region3
    $region8: #{tpu_custom_call.1} parent=1 // loop_exit
      _
    %285 = vsyncpa [#allocation3], 1
    %s286 = scalar_lea.sflag [#allocation3], 1
    %287 = vsyncpa %s286, 1
    %288 = vsyncpa [#allocation4], 1
    %s289 = scalar_lea.sflag [#allocation4], 1
    %290 = vsyncpa %s289, 1

</llo_original>
